<compile_context>
chip_gen: v7x
topology: tpu7x:2x2x1
jax: 0.10.0
libtpu: 0.0.40
codegen_flags: <defaults>
</compile_context>

<pallas_src>
import jax
import jax.numpy as jnp
from jax.experimental import pallas as pl
from jax.experimental.pallas import tpu as pltpu

EPS = 1e-5
LANE = 128


def _round_up(n, m):
    return (n + m - 1) // m * m


def ppo_kernel(x_ref, w1_ref, w2_ref, wh_ref, bn_ref, heads_ref):
    """x_ref: (NB, B, D); w1: (D, Hp); w2: (Hp, Hp); wh: (Hp, 2);
    bn_ref: (4, Hp) = [gamma1; beta1; gamma2; beta2]; heads_ref: (NB, B, 2)."""
    wdt = w1_ref.dtype
    NB, B, D = x_ref.shape
    Hp = w1_ref.shape[1]
    inv_b = 1.0 / B

    def cast(a):  # no-op on the f32 path (decided at trace time)
        return a if a.dtype == wdt else a.astype(wdt)

    def bn_relu(h, gamma, beta):
        # h: (NB*B, Hp) f32; per-mini-batch stats over axis=1 of (NB, B, Hp).
        hb = h.reshape(NB, B, Hp)
        mu = jnp.sum(hb, axis=1, keepdims=True) * inv_b                 # (NB,1,Hp)
        var = jnp.sum((hb - mu) ** 2, axis=1, keepdims=True) * inv_b    # biased var
        scale = gamma * jax.lax.rsqrt(var + EPS)                        # (NB,1,Hp)
        shift = beta - mu * scale
        return jnp.maximum(hb * scale + shift, 0.0).reshape(NB * B, Hp)

    x = x_ref[...].reshape(NB * B, D)

    # fc1 (bias dropped: cancelled by batch-stat BN) + BN + ReLU
    h1 = jnp.dot(cast(x), w1_ref[...], preferred_element_type=jnp.float32)
    h1 = bn_relu(h1, bn_ref[0:1, :], bn_ref[1:2, :])

    # fc2 + BN + ReLU
    h2 = jnp.dot(cast(h1), w2_ref[...], preferred_element_type=jnp.float32)
    h2 = bn_relu(h2, bn_ref[2:3, :], bn_ref[3:4, :])

    # fused actor/critic heads: one (NB*B, Hp) x (Hp, 2) matmul, no bias
    heads = jnp.dot(cast(h2), wh_ref[...], preferred_element_type=jnp.float32)
    heads_ref[...] = heads.reshape(NB, B, 2)


def _vmem_limit_bytes(nb, b, d, hp, weight_dtype):
    """Size the scoped-VMEM limit from the actual footprint (with headroom)."""
    wbytes = jnp.dtype(weight_dtype).itemsize
    weights = (d * hp + hp * hp + hp * 2) * wbytes + 4 * hp * 4   # resident, 1x
    act = nb * b * hp * 4                                          # one f32 activation slab
    io = 2 * (nb * b * d * 4) + 2 * (nb * b * 2 * 4)               # double-buffered x / heads
    footprint = weights + 6 * act + io
    return int(min(max(4 * footprint, 8 * 1024 * 1024), 128 * 1024 * 1024))


def prepare_params(params, weight_dtype=jnp.float32):
    """Pad the hidden dim to a multiple of 128 lanes, drop the BN-cancelled linear
    biases, pack the 4 BN vectors into one (4, Hp) slab, and keep the head biases
    aside (applied in the wrapper). Padded hidden lanes stay exactly zero through
    the whole network (zero weights, gamma=1/beta=0, ReLU), so numerics match."""
    (w1, _b1, g1, be1, w2, _b2, g2, be2, wh, bh) = params
    H = w1.shape[1]
    Hp = _round_up(H, LANE)
    ph = Hp - H
    w1 = jnp.pad(w1, ((0, 0), (0, ph)))
    w2 = jnp.pad(w2, ((0, ph), (0, ph)))
    wh = jnp.pad(wh, ((0, ph), (0, 0)))
    bn = jnp.concatenate(
        [jnp.pad(g1, ((0, 0), (0, ph)), constant_values=1.0),
         jnp.pad(be1, ((0, 0), (0, ph))),
         jnp.pad(g2, ((0, 0), (0, ph)), constant_values=1.0),
         jnp.pad(be2, ((0, 0), (0, ph)))], axis=0).astype(jnp.float32)   # (4, Hp)
    return (w1.astype(weight_dtype), w2.astype(weight_dtype),
            wh.astype(weight_dtype), bn, bh.astype(jnp.float32))


def ppo_forward(x, prepared_params, batches_per_step=None):
    """x: (B, input_dim) for one forward (PyTorch-module semantics), or
    (N, B, input_dim) for N independent forwards (each with its own batch stats)
    fused into a single pallas_call. Returns (actor, critic): ((B,), ()) or
    ((N, B), (N,))."""
    w1, w2, wh, bn, bh = prepared_params
    single = x.ndim == 2
    if single:
        x = x[None]
    N, B, D = x.shape
    Hp = w1.shape[1]

    if batches_per_step is None:
        # Keep >=2 grid steps when possible so "parallel" splits across v7x's
        # two TensorCores; on v5e/v6e (1 TC) pass batches_per_step=N for 1 step.
        batches_per_step = N // 2 if (N >= 2 and N % 2 == 0) else N
    NB = batches_per_step
    assert N % NB == 0, "batches_per_step must divide the number of mini-batches"
    n_steps = N // NB

    resident = pl.BlockSpec(memory_space=pltpu.MemorySpace.VMEM)  # whole array, 1 buffer

    heads = pl.pallas_call(
        ppo_kernel,
        grid=(n_steps,),
        out_shape=jax.ShapeDtypeStruct((N, B, 2), jnp.float32),
        in_specs=[
            pl.BlockSpec((NB, B, D), lambda s: (s, 0, 0)),   # x: NB mini-batches / step
            resident,                                        # w1
            resident,                                        # w2
            resident,                                        # fused actor/critic weights
            resident,                                        # packed BN params (4, Hp)
        ],
        out_specs=pl.BlockSpec((NB, B, 2), lambda s: (s, 0, 0)),
        compiler_params=pltpu.CompilerParams(
            dimension_semantics=("parallel",),
            vmem_limit_bytes=_vmem_limit_bytes(NB, B, D, Hp, w1.dtype),
        ),
    )(x, w1, w2, wh, bn)

    # Head biases + critic mean done in the wrapper (exact; keeps the kernel's
    # output store a single lane-contiguous slab and drops the XLU mean).
    actor = heads[..., 0] + bh[0, 0]                     # (N, B)
    critic = jnp.mean(heads[..., 1], axis=-1) + bh[0, 1]  # (N,)
    if single:
        return actor[0], critic[0]
    return actor, critic


def init_params(key, input_dim, hidden_dim):
    """Deterministic parameter init (PyTorch-Linear-style uniform bounds)."""
    ks = jax.random.split(key, 8)

    def lin(kw, kb, fan_in, fan_out):
        bound = 1.0 / jnp.sqrt(fan_in)
        w = jax.random.uniform(kw, (fan_in, fan_out), jnp.float32, -bound, bound)
        b = jax.random.uniform(kb, (1, fan_out), jnp.float32, -bound, bound)
        return w, b

    w1, b1 = lin(ks[0], ks[1], input_dim, hidden_dim)
    w2, b2 = lin(ks[2], ks[3], hidden_dim, hidden_dim)
    wa, ba = lin(ks[4], ks[5], hidden_dim, 1)
    wc, bc = lin(ks[6], ks[7], hidden_dim, 1)

    # BatchNorm affine params (gamma=1, beta=0, as nn.BatchNorm1d defaults)
    g1 = jnp.ones((1, hidden_dim), jnp.float32)
    be1 = jnp.zeros((1, hidden_dim), jnp.float32)
    g2 = jnp.ones((1, hidden_dim), jnp.float32)
    be2 = jnp.zeros((1, hidden_dim), jnp.float32)

    # Fuse actor/critic heads into one (H, 2) projection.
    wh = jnp.concatenate([wa, wc], axis=1)        # (H, 2)
    bh = jnp.concatenate([ba, bc], axis=1)        # (1, 2)

    return (w1, b1, g1, be1, w2, b2, g2, be2, wh, bh)


def ppo_reference(x, params):
    """Pure-JAX reference matching the PyTorch training-mode forward exactly
    (biases included, (h-mu)^2 variance)."""
    (w1, b1, g1, be1, w2, b2, g2, be2, wh, bh) = params

    def bn(h, g, be):
        mu = jnp.mean(h, axis=0, keepdims=True)
        var = jnp.mean((h - mu) ** 2, axis=0, keepdims=True)
        return (h - mu) / jnp.sqrt(var + EPS) * g + be

    h = jnp.maximum(bn(x @ w1 + b1, g1, be1), 0.0)
    h = jnp.maximum(bn(h @ w2 + b2, g2, be2), 0.0)
    heads = h @ wh + bh
    return heads[:, 0], jnp.mean(heads[:, 1])


if __name__ == "__main__":
    B, INPUT_DIM, HIDDEN_DIM = 8, 32, 192
    N_BATCHES = 6

    key = jax.random.PRNGKey(0)
    kx1, kx2, kp = jax.random.split(key, 3)
    params = init_params(kp, INPUT_DIM, HIDDEN_DIM)

    # --- single mini-batch (exact PyTorch-module forward), f32 weights -------
    x1 = jax.random.normal(kx1, (B, INPUT_DIM), jnp.float32)
    prepared_f32 = prepare_params(params, weight_dtype=jnp.float32)
    actor1, critic1 = ppo_forward(x1, prepared_f32)
    actor1 = jax.block_until_ready(actor1)
    critic1 = jax.block_until_ready(critic1)

    a_ref, c_ref = ppo_reference(x1, params)
    assert actor1.shape == (B,)
    assert critic1.shape == ()
    assert jnp.allclose(actor1, a_ref, atol=1e-4, rtol=1e-4)
    assert jnp.allclose(critic1, c_ref, atol=1e-4, rtol=1e-4)

    # --- N independent mini-batches, f32 weights, 2 grid steps (3 batches/step)
    xs = jax.random.normal(kx2, (N_BATCHES, B, INPUT_DIM), jnp.float32)
    actor_n, critic_n = ppo_forward(xs, prepared_f32)
    actor_n = jax.block_until_ready(actor_n)
    critic_n = jax.block_until_ready(critic_n)

    a_refs = jnp.stack([ppo_reference(xs[i], params)[0] for i in range(N_BATCHES)])
    c_refs = jnp.stack([ppo_reference(xs[i], params)[1] for i in range(N_BATCHES)])
    assert actor_n.shape == (N_BATCHES, B)
    assert critic_n.shape == (N_BATCHES,)
    assert jnp.allclose(actor_n, a_refs, atol=1e-4, rtol=1e-4)
    assert jnp.allclose(critic_n, c_refs, atol=1e-4, rtol=1e-4)

    # --- optional bf16 weight storage, all 6 batches in ONE grid step --------
    prepared_bf16 = prepare_params(params, weight_dtype=jnp.bfloat16)
    actor_b, critic_b = ppo_forward(xs, prepared_bf16, batches_per_step=N_BATCHES)
    actor_b = jax.block_until_ready(actor_b)
    critic_b = jax.block_until_ready(critic_b)
    # looser tolerance: bf16 weight/activation quantization vs the f32 reference
    assert jnp.allclose(actor_b, a_refs, atol=5e-2, rtol=5e-2)
    assert jnp.allclose(critic_b, c_refs, atol=5e-2, rtol=5e-2)

    print("KERNEL_OK")
</pallas_src>

<mosaic_0001>
module attributes {stable_mosaic.version = 11 : i64} {
  func.func @ppo_kernel(%arg0: i32, %arg1: memref<1x8x32xf32, #tpu.memory_space<vmem>>, %arg2: memref<32x256xf32, #tpu.memory_space<vmem>>, %arg3: memref<256x256xf32, #tpu.memory_space<vmem>>, %arg4: memref<256x2xf32, #tpu.memory_space<vmem>>, %arg5: memref<4x256xf32, #tpu.memory_space<vmem>>, %arg6: memref<1x8x2xf32, #tpu.memory_space<vmem>>) attributes {dimension_semantics = [#tpu.dimension_semantics<parallel>], iteration_bounds = array<i64: 1>, scalar_prefetch = 0 : i64, scratch_operands = 0 : i64, tpu.core_type = #tpu.core_type<tc>, window_params = [{transform_indices = @transform_0, window_bounds = array<i64: 1, 8, 32>}, {pipeline_mode = #tpu.pipeline_mode<synchronous>, transform_indices = @transform_1, window_bounds = array<i64: 32, 256>}, {pipeline_mode = #tpu.pipeline_mode<synchronous>, transform_indices = @transform_2, window_bounds = array<i64: 256, 256>}, {pipeline_mode = #tpu.pipeline_mode<synchronous>, transform_indices = @transform_3, window_bounds = array<i64: 256, 2>}, {pipeline_mode = #tpu.pipeline_mode<synchronous>, transform_indices = @transform_4, window_bounds = array<i64: 4, 256>}, {transform_indices = @transform_5, window_bounds = array<i64: 1, 8, 2>}]} {
    %c0 = arith.constant 0 : index
    %c0_0 = arith.constant 0 : index
    %c0_1 = arith.constant 0 : index
    %0 = vector.load %arg1[%c0, %c0_0, %c0_1] : memref<1x8x32xf32, #tpu.memory_space<vmem>>, vector<1x8x32xf32>
    %1 = vector.shape_cast %0 : vector<1x8x32xf32> to vector<8x32xf32>
    %c0_2 = arith.constant 0 : index
    %c0_3 = arith.constant 0 : index
    %2 = vector.load %arg2[%c0_2, %c0_3] : memref<32x256xf32, #tpu.memory_space<vmem>>, vector<32x256xf32>
    %cst = arith.constant dense<0.000000e+00> : vector<8x256xf32>
    %3 = tpu.matmul %1, %2, %cst {dimension_numbers = #tpu.dot_dimension_numbers<[1], [0], [0], [1], [0, 0, 1, 1], [], []>} : vector<8x32xf32>, vector<32x256xf32>, vector<8x256xf32> -> vector<8x256xf32>
    %c0_4 = arith.constant 0 : index
    %c0_5 = arith.constant 0 : index
    %4 = vector.load %arg5[%c0_4, %c0_5] : memref<4x256xf32, #tpu.memory_space<vmem>>, vector<1x256xf32>
    %c1 = arith.constant 1 : index
    %c0_6 = arith.constant 0 : index
    %5 = vector.load %arg5[%c1, %c0_6] : memref<4x256xf32, #tpu.memory_space<vmem>>, vector<1x256xf32>
    %6 = vector.shape_cast %3 : vector<8x256xf32> to vector<1x8x256xf32>
    %cst_7 = arith.constant dense<0.000000e+00> : vector<1x256xf32>
    %7 = vector.multi_reduction <add>, %6, %cst_7 [1] : vector<1x8x256xf32> to vector<1x256xf32>
    %8 = vector.shape_cast %7 : vector<1x256xf32> to vector<1x1x256xf32>
    %cst_8 = arith.constant 1.250000e-01 : f32
    %9 = vector.broadcast %cst_8 : f32 to vector<1x1x256xf32>
    %10 = arith.mulf %8, %9 : vector<1x1x256xf32>
    %11 = vector.broadcast %10 : vector<1x1x256xf32> to vector<1x8x256xf32>
    %12 = arith.subf %6, %11 : vector<1x8x256xf32>
    %13 = arith.mulf %12, %12 : vector<1x8x256xf32>
    %cst_9 = arith.constant dense<0.000000e+00> : vector<1x256xf32>
    %14 = vector.multi_reduction <add>, %13, %cst_9 [1] : vector<1x8x256xf32> to vector<1x256xf32>
    %15 = vector.shape_cast %14 : vector<1x256xf32> to vector<1x1x256xf32>
    %cst_10 = arith.constant 1.250000e-01 : f32
    %16 = vector.broadcast %cst_10 : f32 to vector<1x1x256xf32>
    %17 = arith.mulf %15, %16 : vector<1x1x256xf32>
    %cst_11 = arith.constant 9.99999974E-6 : f32
    %18 = vector.broadcast %cst_11 : f32 to vector<1x1x256xf32>
    %19 = arith.addf %17, %18 : vector<1x1x256xf32>
    %20 = math.rsqrt %19 : vector<1x1x256xf32>
    %21 = vector.shape_cast %4 : vector<1x256xf32> to vector<1x1x256xf32>
    %22 = arith.mulf %21, %20 : vector<1x1x256xf32>
    %23 = arith.mulf %10, %22 : vector<1x1x256xf32>
    %24 = vector.shape_cast %5 : vector<1x256xf32> to vector<1x1x256xf32>
    %25 = arith.subf %24, %23 : vector<1x1x256xf32>
    %26 = vector.broadcast %22 : vector<1x1x256xf32> to vector<1x8x256xf32>
    %27 = arith.mulf %6, %26 : vector<1x8x256xf32>
    %28 = vector.broadcast %25 : vector<1x1x256xf32> to vector<1x8x256xf32>
    %29 = arith.addf %27, %28 : vector<1x8x256xf32>
    %cst_12 = arith.constant 0.000000e+00 : f32
    %30 = vector.broadcast %cst_12 : f32 to vector<1x8x256xf32>
    %31 = arith.maximumf %29, %30 : vector<1x8x256xf32>
    %32 = vector.shape_cast %31 : vector<1x8x256xf32> to vector<8x256xf32>
    %c0_13 = arith.constant 0 : index
    %c0_14 = arith.constant 0 : index
    %33 = vector.load %arg3[%c0_13, %c0_14] : memref<256x256xf32, #tpu.memory_space<vmem>>, vector<256x256xf32>
    %cst_15 = arith.constant dense<0.000000e+00> : vector<8x256xf32>
    %34 = tpu.matmul %32, %33, %cst_15 {dimension_numbers = #tpu.dot_dimension_numbers<[1], [0], [0], [1], [0, 0, 1, 1], [], []>} : vector<8x256xf32>, vector<256x256xf32>, vector<8x256xf32> -> vector<8x256xf32>
    %c2 = arith.constant 2 : index
    %c0_16 = arith.constant 0 : index
    %35 = vector.load %arg5[%c2, %c0_16] : memref<4x256xf32, #tpu.memory_space<vmem>>, vector<1x256xf32>
    %c3 = arith.constant 3 : index
    %c0_17 = arith.constant 0 : index
    %36 = vector.load %arg5[%c3, %c0_17] : memref<4x256xf32, #tpu.memory_space<vmem>>, vector<1x256xf32>
    %37 = vector.shape_cast %34 : vector<8x256xf32> to vector<1x8x256xf32>
    %cst_18 = arith.constant dense<0.000000e+00> : vector<1x256xf32>
    %38 = vector.multi_reduction <add>, %37, %cst_18 [1] : vector<1x8x256xf32> to vector<1x256xf32>
    %39 = vector.shape_cast %38 : vector<1x256xf32> to vector<1x1x256xf32>
    %cst_19 = arith.constant 1.250000e-01 : f32
    %40 = vector.broadcast %cst_19 : f32 to vector<1x1x256xf32>
    %41 = arith.mulf %39, %40 : vector<1x1x256xf32>
    %42 = vector.broadcast %41 : vector<1x1x256xf32> to vector<1x8x256xf32>
    %43 = arith.subf %37, %42 : vector<1x8x256xf32>
    %44 = arith.mulf %43, %43 : vector<1x8x256xf32>
    %cst_20 = arith.constant dense<0.000000e+00> : vector<1x256xf32>
    %45 = vector.multi_reduction <add>, %44, %cst_20 [1] : vector<1x8x256xf32> to vector<1x256xf32>
    %46 = vector.shape_cast %45 : vector<1x256xf32> to vector<1x1x256xf32>
    %cst_21 = arith.constant 1.250000e-01 : f32
    %47 = vector.broadcast %cst_21 : f32 to vector<1x1x256xf32>
    %48 = arith.mulf %46, %47 : vector<1x1x256xf32>
    %cst_22 = arith.constant 9.99999974E-6 : f32
    %49 = vector.broadcast %cst_22 : f32 to vector<1x1x256xf32>
    %50 = arith.addf %48, %49 : vector<1x1x256xf32>
    %51 = math.rsqrt %50 : vector<1x1x256xf32>
    %52 = vector.shape_cast %35 : vector<1x256xf32> to vector<1x1x256xf32>
    %53 = arith.mulf %52, %51 : vector<1x1x256xf32>
    %54 = arith.mulf %41, %53 : vector<1x1x256xf32>
    %55 = vector.shape_cast %36 : vector<1x256xf32> to vector<1x1x256xf32>
    %56 = arith.subf %55, %54 : vector<1x1x256xf32>
    %57 = vector.broadcast %53 : vector<1x1x256xf32> to vector<1x8x256xf32>
    %58 = arith.mulf %37, %57 : vector<1x8x256xf32>
    %59 = vector.broadcast %56 : vector<1x1x256xf32> to vector<1x8x256xf32>
    %60 = arith.addf %58, %59 : vector<1x8x256xf32>
    %cst_23 = arith.constant 0.000000e+00 : f32
    %61 = vector.broadcast %cst_23 : f32 to vector<1x8x256xf32>
    %62 = arith.maximumf %60, %61 : vector<1x8x256xf32>
    %63 = vector.shape_cast %62 : vector<1x8x256xf32> to vector<8x256xf32>
    %c0_24 = arith.constant 0 : index
    %c0_25 = arith.constant 0 : index
    %64 = vector.load %arg4[%c0_24, %c0_25] : memref<256x2xf32, #tpu.memory_space<vmem>>, vector<256x2xf32>
    %cst_26 = arith.constant dense<0.000000e+00> : vector<8x2xf32>
    %65 = tpu.matmul %63, %64, %cst_26 {dimension_numbers = #tpu.dot_dimension_numbers<[1], [0], [0], [1], [0, 0, 1, 1], [], []>} : vector<8x256xf32>, vector<256x2xf32>, vector<8x2xf32> -> vector<8x2xf32>
    %66 = vector.shape_cast %65 : vector<8x2xf32> to vector<1x8x2xf32>
    %c0_27 = arith.constant 0 : index
    %c0_28 = arith.constant 0 : index
    %c0_29 = arith.constant 0 : index
    %67 = vector.load %arg6[%c0_27, %c0_28, %c0_29] : memref<1x8x2xf32, #tpu.memory_space<vmem>>, vector<1x8x2xf32>
    tpu.vector_store %arg6[%c0_27, %c0_28, %c0_29], %66 {strides = array<i32>} : memref<1x8x2xf32, #tpu.memory_space<vmem>>, vector<1x8x2xf32>,
    return
  }
  func.func @transform_0(%arg0: i32) -> (i32, i32, i32) {
    %c0_i32 = arith.constant 0 : i32
    %c0_i32_0 = arith.constant 0 : i32
    %c0_i32_1 = arith.constant 0 : i32
    return %arg0, %c0_i32, %c0_i32_0 : i32, i32, i32
  }
  func.func @transform_1(%arg0: i32) -> (i32, i32) {
    %c0_i32 = arith.constant 0 : i32
    %c0_i32_0 = arith.constant 0 : i32
    %c0_i32_1 = arith.constant 0 : i32
    return %c0_i32, %c0_i32_0 : i32, i32
  }
  func.func @transform_2(%arg0: i32) -> (i32, i32) {
    %c0_i32 = arith.constant 0 : i32
    %c0_i32_0 = arith.constant 0 : i32
    %c0_i32_1 = arith.constant 0 : i32
    return %c0_i32, %c0_i32_0 : i32, i32
  }
  func.func @transform_3(%arg0: i32) -> (i32, i32) {
    %c0_i32 = arith.constant 0 : i32
    %c0_i32_0 = arith.constant 0 : i32
    %c0_i32_1 = arith.constant 0 : i32
    return %c0_i32, %c0_i32_0 : i32, i32
  }
  func.func @transform_4(%arg0: i32) -> (i32, i32) {
    %c0_i32 = arith.constant 0 : i32
    %c0_i32_0 = arith.constant 0 : i32
    %c0_i32_1 = arith.constant 0 : i32
    return %c0_i32, %c0_i32_0 : i32, i32
  }
  func.func @transform_5(%arg0: i32) -> (i32, i32, i32) {
    %c0_i32 = arith.constant 0 : i32
    %c0_i32_0 = arith.constant 0 : i32
    %c0_i32_1 = arith.constant 0 : i32
    return %arg0, %c0_i32, %c0_i32_0 : i32, i32, i32
  }
}

</mosaic_0001>

<llo_original>
// kernel: tpu_custom_call.1
$region0: #{tpu_custom_call.1}
  #allocation0 [shape = 'u32[]', space=smem, size = 0x4, offset = 0x4, fixed_abs, tag = 'smem constant byte address 0x4 - core index']
  #allocation1 [shape = 'u32[144,128]{1,0:T(1,128)}', space=vmem, size = 0x12000, scoped, tag = 'internal scratch']
  %s0 = inlined_call_operand.vmem [shape: f32[1,8,32], index: 0, kind: input, shape index: {}]
  %s1 = inlined_call_operand.vmem [shape: f32[32,256], index: 1, kind: input, shape index: {}]
  %s2 = inlined_call_operand.hbm [shape: f32[256,256], index: 2, kind: input, shape index: {}]
  %s3 = inlined_call_operand.vmem [shape: f32[256,2], index: 3, kind: input, shape index: {}]
  %s4 = inlined_call_operand.vmem [shape: f32[4,256], index: 4, kind: input, shape index: {}]
  %s5 = inlined_call_operand.vmem [shape: f32[1,8,2], index: 5, kind: output, shape index: {}]
  %s6 = sld [smem:[#allocation0]]
  $region34: #{tpu_custom_call.1} parent=0
    _
  %s8 = ssub.s32 1, %s6
  %s9 = scalar_select 0, %s8, %s6
  $region1: #{tpu_custom_call.1} parent=0
    #allocation2 [shape = 'u8[262144]{0}', space=vmem, size = 0x40000, scoped, tag = 'input window, operand 2, single buffered']
    #allocation3 [shape = 's32[1]{0}', space=sflag, size = 0x4, scoped, tag = 'scoped memory for tpu_custom_call.1']
    %10 = vsyncpa [#allocation3], 0
    // Predicated region
    $region2: #{tpu_custom_call.1} parent=1 // pred_check
      _
    $region3: #{tpu_custom_call.1} parent=1 // pred_check_branch
      %12 = sbr.rel (0) target = $region5
    $region4: #{tpu_custom_call.1} parent=1 // pred_region
      _
    $region5: #{tpu_custom_call.1} parent=1 // pred_fallthru
      _
    // Predicated region
    $region6: #{tpu_custom_call.1} parent=1 // pred_check
      _
    $region7: #{tpu_custom_call.1} parent=1 // pred_check_branch
      %14 = sbr.rel (0) target = $region9
    $region8: #{tpu_custom_call.1} parent=1 // pred_region
      _
    $region9: #{tpu_custom_call.1} parent=1 // pred_fallthru
      _
    // Predicated region
    $region10: #{tpu_custom_call.1} parent=1 // pred_check
      _
    $region11: #{tpu_custom_call.1} parent=1 // pred_check_branch
      %16 = sbr.rel (0) target = $region13
    $region12: #{tpu_custom_call.1} parent=1 // pred_region
      %s18 = ssub.s32 8192, 8192
      %19 = vsyncadd [#allocation3], %s18
      %s20 = sshll.u32 [#allocation2], 4
      %s21 = int_to_ptr.vmem [resolvable:$true] %s20
      %26 = dma.hbm_to_vmem [thread:$0]  %s2, 8192, %s21, [#allocation3], 256, 256, 16
    $region13: #{tpu_custom_call.1} parent=1 // pred_fallthru
      _
    // Predicated region
    $region14: #{tpu_custom_call.1} parent=1 // pred_check
      _
    $region15: #{tpu_custom_call.1} parent=1 // pred_check_branch
      %28 = sbr.rel (0) target = $region17
    $region16: #{tpu_custom_call.1} parent=1 // pred_region
      _
    $region17: #{tpu_custom_call.1} parent=1 // pred_fallthru
      _
    // Predicated region
    $region18: #{tpu_custom_call.1} parent=1 // pred_check
      _
    $region19: #{tpu_custom_call.1} parent=1 // pred_check_branch
      %30 = sbr.rel (0) target = $region21
    $region20: #{tpu_custom_call.1} parent=1 // pred_region
      _
    $region21: #{tpu_custom_call.1} parent=1 // pred_fallthru
      _
    // Predicated region
    $region22: #{tpu_custom_call.1} parent=1 // pred_check
      _
    $region23: #{tpu_custom_call.1} parent=1 // pred_check_branch
      %32 = sbr.rel (0) target = $region25
    $region24: #{tpu_custom_call.1} parent=1 // pred_region
      %33 = dma.done [#allocation3], 8192
    $region25: #{tpu_custom_call.1} parent=1 // pred_fallthru
      _
    %v34 = vld [vmem:[%s0] sm:$0xff]
    %v35 = vld [vmem:[%s1] sm:$0xff]
    %v36 = vld [vmem:[%s1 + $0x8] sm:$0xff]
    %v37 = vld [vmem:[%s1 + $0x10] sm:$0xff]
    %v38 = vld [vmem:[%s1 + $0x18] sm:$0xff]
    %v39 = vld [vmem:[%s1 + $0x20] sm:$0xff]
    %v40 = vld [vmem:[%s1 + $0x28] sm:$0xff]
    %v41 = vld [vmem:[%s1 + $0x30] sm:$0xff]
    %v42 = vld [vmem:[%s1 + $0x38] sm:$0xff]
    %vm43 = vcmask 261120
    %v45 = vsel %vm43, %v34, 0
    %47 = vmatprep.subr.mxu0 %v36
    %48 = vmatpush1.msra.mxu0 %v35
    %49 = vmatprep.subr.mxu0 %v38
    %50 = vmatpush1.msra.mxu0 %v37
    %51 = vmatprep.subr.mxu0 %v40
    %52 = vmatpush1.msra.mxu0 %v39
    %53 = vmatprep.subr.mxu0 %v42
    %54 = vmatpush1.msra.mxu0 %v41
    %55 = vmatprep.subr.mxu0 0.0
    %56 = vmatpush1.msra.mxu0 0.0
    %57 = vmatprep.subr.mxu0 0.0
    %58 = vmatpush1.msra.mxu0 0.0
    %59 = vmatprep.subr.mxu0 0.0
    %60 = vmatpush1.msra.mxu0 0.0
    %61 = vmatprep.subr.mxu0 0.0
    %62 = vmatpush1.msra.mxu0 0.0
    %63 = vmatprep.subr.mxu0 0.0
    %64 = vmatpush1.msra.mxu0 0.0
    %65 = vmatprep.subr.mxu0 0.0
    %66 = vmatpush1.msra.mxu0 0.0
    %67 = vmatprep.subr.mxu0 0.0
    %68 = vmatpush1.msra.mxu0 0.0
    %69 = vmatprep.subr.mxu0 0.0
    %70 = vmatpush1.msra.mxu0 0.0
    %71 = vmatprep.subr.mxu0 0.0
    %72 = vmatpush1.msra.mxu0 0.0
    %73 = vmatprep.subr.mxu0 0.0
    %74 = vmatpush1.msra.mxu0 0.0
    %75 = vmatprep.subr.mxu0 0.0
    %76 = vmatpush1.msra.mxu0 0.0
    %77 = vmatprep.subr.mxu0 0.0
    %78 = vmatpush1.msra.mxu0 0.0
    %79 = vmatprep.subr.mxu0 0.0
    %80 = vmatpush1.msra.mxu0 0.0
    %81 = vmatprep.subr.mxu0 0.0
    %82 = vmatpush1.msra.mxu0 0.0
    %83 = vmatprep.subr.mxu0 0.0
    %84 = vmatpush1.msra.mxu0 0.0
    %85 = vmatprep.subr.mxu0 0.0
    %86 = vmatpush1.msra.mxu0 0.0
    %87 = vmatprep.subr.mxu0 0.0
    %88 = vmatpush1.msra.mxu0 0.0
    %89 = vmatprep.subr.mxu0 0.0
    %90 = vmatpush1.msra.mxu0 0.0
    %91 = vmatprep.subr.mxu0 0.0
    %92 = vmatpush1.msra.mxu0 0.0
    %93 = vmatprep.subr.mxu0 0.0
    %94 = vmatpush1.msra.mxu0 0.0
    %95 = vmatprep.subr.mxu0 0.0
    %96 = vmatpush1.msra.mxu0 0.0
    %97 = vmatprep.subr.mxu0 0.0
    %98 = vmatpush1.msra.mxu0 0.0
    %99 = vmatprep.subr.mxu0 0.0
    %100 = vmatpush1.msra.mxu0 0.0
    %101 = vmatprep.subr.mxu0 0.0
    %102 = vmatpush1.msra.mxu0 0.0
    %103 = vmatprep.subr.mxu0 0.0
    %104 = vmatpush1.msra.mxu0 0.0
    %105 = vmatprep.subr.mxu0 0.0
    %106 = vmatpush1.msra.mxu0 0.0
    %107 = vmatprep.subr.mxu0 0.0
    %108 = vmatpush1.msra.mxu0 0.0
    %109 = vmatprep.subr.mxu0 0.0
    %110 = vmatpush1.msra.mxu0 0.0
    %111 = vmatprep.mubr.f32.mxu0 0.0
    %112 = vmatmul.mubr.f32.gmra.mrb[0].mxu0 %v45
    %v113 = vpop.f32.mrb[0].mxu0
    %v114 = vadd.f32 0.0, %v113
    %v115 = vpop.f32.mrb[0].mxu0
    %v116 = vadd.f32 0.0, %v115
    %117 = vdwg.mxu0
    %v118 = vld [vmem:[%s4] ss:$4 sm:$0x3]
    %s119 = scalar_lea.vmem %s4, 1
    %v120 = vld [vmem:[%s119] ss:$4 sm:$0x3]
    %v121 = vrot.slane %v114, 4
    %v122 = vadd.f32 %v114, %v121
    %v123 = vrot.slane %v122, 2
    %v124 = vadd.f32 %v122, %v123
    %v125 = vrot.slane %v124, 1
    %v126 = vadd.f32 %v124, %v125
    %v127 = vrot.slane %v116, 4
    %v128 = vadd.f32 %v116, %v127
    %v129 = vrot.slane %v128, 2
    %v130 = vadd.f32 %v128, %v129
    %v131 = vrot.slane %v130, 1
    %v132 = vadd.f32 %v130, %v131
    %v133 = vmul.f32 %v126, 0.125
    %v134 = vmul.f32 %v132, 0.125
    %v135 = vsub.f32 %v114, %v133
    %v136 = vsub.f32 %v116, %v134
    %v137 = vmul.f32 %v135, %v135
    %v138 = vmul.f32 %v136, %v136
    %v139 = vrot.slane %v137, 4
    %v140 = vadd.f32 %v137, %v139
    %v141 = vrot.slane %v140, 2
    %v142 = vadd.f32 %v140, %v141
    %v143 = vrot.slane %v142, 1
    %v144 = vadd.f32 %v142, %v143
    %v145 = vrot.slane %v138, 4
    %v146 = vadd.f32 %v138, %v145
    %v147 = vrot.slane %v146, 2
    %v148 = vadd.f32 %v146, %v147
    %v149 = vrot.slane %v148, 1
    %v150 = vadd.f32 %v148, %v149
    %v151 = vmul.f32 %v144, 0.125
    %v152 = vmul.f32 %v150, 0.125
    %v153 = vadd.f32 %v151, 1e-05
    %v154 = vadd.f32 %v152, 1e-05
    %v155 = vrsqrt.pop %v153
    %v156 = vrsqrt.pop %v154
    %v159 = vcombine.low %v155, %v156
    %v161 = vunpack.c.l.s4 1966171168
    %v162 = vunpack.c.0.s8 %v161
    %v163 = vlaneseq
    %v164 = vshrl.u32 %v163, 7
    %v165 = vsub.s32 %v162, %v164
    %v166 = vrot.slane %v159, %v165
    %v168 = vunpack.c.l.s4 1966171168
    %v169 = vunpack.c.0.s8 %v168
    %v170 = vlaneseq
    %v171 = vshrl.u32 %v170, 7
    %v172 = vsub.s32 %v169, %v171
    %v173 = vrot.slane %v166, %v172
    %v175 = vmul.f32 %v118, %v173
    %v177 = vlaneseq
    %v178 = vshrl.u32 %v177, 7
    %v179 = vsub.s32 0, %v178
    %v180 = vrot.slane %v175, %v179
    %v181 = vlaneseq
    %v182 = vshrl.u32 %v181, 7
    %v183 = vsub.s32 1, %v182
    %v184 = vrot.slane %v175, %v183
    %v187 = vmul.f32 %v133, %v180
    %v188 = vmul.f32 %v134, %v184
    %v191 = vcombine.low %v187, %v188
    %v193 = vunpack.c.l.s4 1966171168
    %v194 = vunpack.c.0.s8 %v193
    %v195 = vlaneseq
    %v196 = vshrl.u32 %v195, 7
    %v197 = vsub.s32 %v194, %v196
    %v198 = vrot.slane %v191, %v197
    %v200 = vunpack.c.l.s4 1966171168
    %v201 = vunpack.c.0.s8 %v200
    %v202 = vlaneseq
    %v203 = vshrl.u32 %v202, 7
    %v204 = vsub.s32 %v201, %v203
    %v205 = vrot.slane %v198, %v204
    %v207 = vsub.f32 %v120, %v205
    %v208 = vmul.f32 %v114, %v180
    %v209 = vmul.f32 %v116, %v184
    %v211 = vlaneseq
    %v212 = vshrl.u32 %v211, 7
    %v213 = vsub.s32 0, %v212
    %v214 = vrot.slane %v207, %v213
    %v215 = vlaneseq
    %v216 = vshrl.u32 %v215, 7
    %v217 = vsub.s32 1, %v216
    %v218 = vrot.slane %v207, %v217
    %v221 = vadd.f32 %v208, %v214
    %v222 = vadd.f32 %v209, %v218
    %v223 = vmax.f32 %v221, 0.0
    %v224 = vmax.f32 %v222, 0.0
    %v225 = vld [vmem:[#allocation2] sm:$0xff]
    %v226 = vld [vmem:[#allocation2 + $0x8] sm:$0xff]
    %v227 = vld [vmem:[#allocation2 + $0x10] sm:$0xff]
    %v228 = vld [vmem:[#allocation2 + $0x18] sm:$0xff]
    %v229 = vld [vmem:[#allocation2 + $0x20] sm:$0xff]
    %v230 = vld [vmem:[#allocation2 + $0x28] sm:$0xff]
    %v231 = vld [vmem:[#allocation2 + $0x30] sm:$0xff]
    %v232 = vld [vmem:[#allocation2 + $0x38] sm:$0xff]
    %v233 = vld [vmem:[#allocation2 + $0x40] sm:$0xff]
    %v234 = vld [vmem:[#allocation2 + $0x48] sm:$0xff]
    %v235 = vld [vmem:[#allocation2 + $0x50] sm:$0xff]
    %v236 = vld [vmem:[#allocation2 + $0x58] sm:$0xff]
    %v237 = vld [vmem:[#allocation2 + $0x60] sm:$0xff]
    %v238 = vld [vmem:[#allocation2 + $0x68] sm:$0xff]
    %v239 = vld [vmem:[#allocation2 + $0x70] sm:$0xff]
    %v240 = vld [vmem:[#allocation2 + $0x78] sm:$0xff]
    %v241 = vld [vmem:[#allocation2 + $0x80] sm:$0xff]
    %v242 = vld [vmem:[#allocation2 + $0x88] sm:$0xff]
    %v243 = vld [vmem:[#allocation2 + $0x90] sm:$0xff]
    %v244 = vld [vmem:[#allocation2 + $0x98] sm:$0xff]
    %v245 = vld [vmem:[#allocation2 + $0xa0] sm:$0xff]
    %v246 = vld [vmem:[#allocation2 + $0xa8] sm:$0xff]
    %v247 = vld [vmem:[#allocation2 + $0xb0] sm:$0xff]
    %v248 = vld [vmem:[#allocation2 + $0xb8] sm:$0xff]
    %v249 = vld [vmem:[#allocation2 + $0xc0] sm:$0xff]
    %v250 = vld [vmem:[#allocation2 + $0xc8] sm:$0xff]
    %v251 = vld [vmem:[#allocation2 + $0xd0] sm:$0xff]
    %v252 = vld [vmem:[#allocation2 + $0xd8] sm:$0xff]
    %v253 = vld [vmem:[#allocation2 + $0xe0] sm:$0xff]
    %v254 = vld [vmem:[#allocation2 + $0xe8] sm:$0xff]
    %v255 = vld [vmem:[#allocation2 + $0xf0] sm:$0xff]
    %v256 = vld [vmem:[#allocation2 + $0xf8] sm:$0xff]
    %v257 = vld [vmem:[#allocation2 + $0x100] sm:$0xff]
    %v258 = vld [vmem:[#allocation2 + $0x108] sm:$0xff]
    %v259 = vld [vmem:[#allocation2 + $0x110] sm:$0xff]
    %v260 = vld [vmem:[#allocation2 + $0x118] sm:$0xff]
    %v261 = vld [vmem:[#allocation2 + $0x120] sm:$0xff]
    %v262 = vld [vmem:[#allocation2 + $0x128] sm:$0xff]
    %v263 = vld [vmem:[#allocation2 + $0x130] sm:$0xff]
    %v264 = vld [vmem:[#allocation2 + $0x138] sm:$0xff]
    %v265 = vld [vmem:[#allocation2 + $0x140] sm:$0xff]
    %v266 = vld [vmem:[#allocation2 + $0x148] sm:$0xff]
    %v267 = vld [vmem:[#allocation2 + $0x150] sm:$0xff]
    %v268 = vld [vmem:[#allocation2 + $0x158] sm:$0xff]
    %v269 = vld [vmem:[#allocation2 + $0x160] sm:$0xff]
    %v270 = vld [vmem:[#allocation2 + $0x168] sm:$0xff]
    %v271 = vld [vmem:[#allocation2 + $0x170] sm:$0xff]
    %v272 = vld [vmem:[#allocation2 + $0x178] sm:$0xff]
    %v273 = vld [vmem:[#allocation2 + $0x180] sm:$0xff]
    %v274 = vld [vmem:[#allocation2 + $0x188] sm:$0xff]
    %v275 = vld [vmem:[#allocation2 + $0x190] sm:$0xff]
    %v276 = vld [vmem:[#allocation2 + $0x198] sm:$0xff]
    %v277 = vld [vmem:[#allocation2 + $0x1a0] sm:$0xff]
    %v278 = vld [vmem:[#allocation2 + $0x1a8] sm:$0xff]
    %v279 = vld [vmem:[#allocation2 + $0x1b0] sm:$0xff]
    %v280 = vld [vmem:[#allocation2 + $0x1b8] sm:$0xff]
    %v281 = vld [vmem:[#allocation2 + $0x1c0] sm:$0xff]
    %v282 = vld [vmem:[#allocation2 + $0x1c8] sm:$0xff]
    %v283 = vld [vmem:[#allocation2 + $0x1d0] sm:$0xff]
    %v284 = vld [vmem:[#allocation2 + $0x1d8] sm:$0xff]
    %v285 = vld [vmem:[#allocation2 + $0x1e0] sm:$0xff]
    %v286 = vld [vmem:[#allocation2 + $0x1e8] sm:$0xff]
    %v287 = vld [vmem:[#allocation2 + $0x1f0] sm:$0xff]
    %v288 = vld [vmem:[#allocation2 + $0x1f8] sm:$0xff]
    %289 = vmatprep.subr.mxu0 %v226
    %290 = vmatpush1.msra.mxu0 %v225
    %291 = vmatprep.subr.mxu0 %v228
    %292 = vmatpush1.msra.mxu0 %v227
    %293 = vmatprep.subr.mxu0 %v230
    %294 = vmatpush1.msra.mxu0 %v229
    %295 = vmatprep.subr.mxu0 %v232
    %296 = vmatpush1.msra.mxu0 %v231
    %297 = vmatprep.subr.mxu0 %v234
    %298 = vmatpush1.msra.mxu0 %v233
    %299 = vmatprep.subr.mxu0 %v236
    %300 = vmatpush1.msra.mxu0 %v235
    %301 = vmatprep.subr.mxu0 %v238
    %302 = vmatpush1.msra.mxu0 %v237
    %303 = vmatprep.subr.mxu0 %v240
    %304 = vmatpush1.msra.mxu0 %v239
    %305 = vmatprep.subr.mxu0 %v242
    %306 = vmatpush1.msra.mxu0 %v241
    %307 = vmatprep.subr.mxu0 %v244
    %308 = vmatpush1.msra.mxu0 %v243
    %309 = vmatprep.subr.mxu0 %v246
    %310 = vmatpush1.msra.mxu0 %v245
    %311 = vmatprep.subr.mxu0 %v248
    %312 = vmatpush1.msra.mxu0 %v247
    %313 = vmatprep.subr.mxu0 %v250
    %314 = vmatpush1.msra.mxu0 %v249
    %315 = vmatprep.subr.mxu0 %v252
    %316 = vmatpush1.msra.mxu0 %v251
    %317 = vmatprep.subr.mxu0 %v254
    %318 = vmatpush1.msra.mxu0 %v253
    %319 = vmatprep.subr.mxu0 %v256
    %320 = vmatpush1.msra.mxu0 %v255
    %321 = vmatprep.subr.mxu0 %v258
    %322 = vmatpush1.msra.mxu0 %v257
    %323 = vmatprep.subr.mxu0 %v260
    %324 = vmatpush1.msra.mxu0 %v259
    %325 = vmatprep.subr.mxu0 %v262
    %326 = vmatpush1.msra.mxu0 %v261
    %327 = vmatprep.subr.mxu0 %v264
    %328 = vmatpush1.msra.mxu0 %v263
    %329 = vmatprep.subr.mxu0 %v266
    %330 = vmatpush1.msra.mxu0 %v265
    %331 = vmatprep.subr.mxu0 %v268
    %332 = vmatpush1.msra.mxu0 %v267
    %333 = vmatprep.subr.mxu0 %v270
    %334 = vmatpush1.msra.mxu0 %v269
    %335 = vmatprep.subr.mxu0 %v272
    %336 = vmatpush1.msra.mxu0 %v271
    %337 = vmatprep.subr.mxu0 %v274
    %338 = vmatpush1.msra.mxu0 %v273
    %339 = vmatprep.subr.mxu0 %v276
    %340 = vmatpush1.msra.mxu0 %v275
    %341 = vmatprep.subr.mxu0 %v278
    %342 = vmatpush1.msra.mxu0 %v277
    %343 = vmatprep.subr.mxu0 %v280
    %344 = vmatpush1.msra.mxu0 %v279
    %345 = vmatprep.subr.mxu0 %v282
    %346 = vmatpush1.msra.mxu0 %v281
    %347 = vmatprep.subr.mxu0 %v284
    %348 = vmatpush1.msra.mxu0 %v283
    %349 = vmatprep.subr.mxu0 %v286
    %350 = vmatpush1.msra.mxu0 %v285
    %351 = vmatprep.subr.mxu0 %v288
    %352 = vmatpush1.msra.mxu0 %v287
    %353 = vmatprep.mubr.f32.mxu0 %v224
    %354 = vmatmul.mubr.f32.gmra.mrb[0].mxu0 %v223
    %v355 = vpop.f32.mrb[0].mxu0
    %v356 = vadd.f32 0.0, %v355
    %v357 = vpop.f32.mrb[0].mxu0
    %v358 = vadd.f32 0.0, %v357
    %359 = vdwg.mxu0
    %s360 = scalar_lea.vmem %s4, 2
    %v361 = vld [vmem:[%s360] ss:$4 sm:$0x3]
    %s362 = scalar_lea.vmem %s4, 3
    %v363 = vld [vmem:[%s362] ss:$4 sm:$0x3]
    %v364 = vrot.slane %v356, 4
    %v365 = vadd.f32 %v356, %v364
    %v366 = vrot.slane %v365, 2
    %v367 = vadd.f32 %v365, %v366
    %v368 = vrot.slane %v367, 1
    %v369 = vadd.f32 %v367, %v368
    %v370 = vrot.slane %v358, 4
    %v371 = vadd.f32 %v358, %v370
    %v372 = vrot.slane %v371, 2
    %v373 = vadd.f32 %v371, %v372
    %v374 = vrot.slane %v373, 1
    %v375 = vadd.f32 %v373, %v374
    %v376 = vmul.f32 %v369, 0.125
    %v377 = vmul.f32 %v375, 0.125
    %v378 = vsub.f32 %v356, %v376
    %v379 = vsub.f32 %v358, %v377
    %v380 = vmul.f32 %v378, %v378
    %v381 = vmul.f32 %v379, %v379
    %v382 = vrot.slane %v380, 4
    %v383 = vadd.f32 %v380, %v382
    %v384 = vrot.slane %v383, 2
    %v385 = vadd.f32 %v383, %v384
    %v386 = vrot.slane %v385, 1
    %v387 = vadd.f32 %v385, %v386
    %v388 = vrot.slane %v381, 4
    %v389 = vadd.f32 %v381, %v388
    %v390 = vrot.slane %v389, 2
    %v391 = vadd.f32 %v389, %v390
    %v392 = vrot.slane %v391, 1
    %v393 = vadd.f32 %v391, %v392
    %v394 = vmul.f32 %v387, 0.125
    %v395 = vmul.f32 %v393, 0.125
    %v396 = vadd.f32 %v394, 1e-05
    %v397 = vadd.f32 %v395, 1e-05
    %v398 = vrsqrt.pop %v396
    %v399 = vrsqrt.pop %v397
    %v402 = vcombine.low %v398, %v399
    %v404 = vunpack.c.l.s4 1966171168
    %v405 = vunpack.c.0.s8 %v404
    %v406 = vlaneseq
    %v407 = vshrl.u32 %v406, 7
    %v408 = vsub.s32 %v405, %v407
    %v409 = vrot.slane %v402, %v408
    %v411 = vunpack.c.l.s4 1966171168
    %v412 = vunpack.c.0.s8 %v411
    %v413 = vlaneseq
    %v414 = vshrl.u32 %v413, 7
    %v415 = vsub.s32 %v412, %v414
    %v416 = vrot.slane %v409, %v415
    %v418 = vmul.f32 %v361, %v416
    %v420 = vlaneseq
    %v421 = vshrl.u32 %v420, 7
    %v422 = vsub.s32 0, %v421
    %v423 = vrot.slane %v418, %v422
    %v424 = vlaneseq
    %v425 = vshrl.u32 %v424, 7
    %v426 = vsub.s32 1, %v425
    %v427 = vrot.slane %v418, %v426
    %v430 = vmul.f32 %v376, %v423
    %v431 = vmul.f32 %v377, %v427
    %v434 = vcombine.low %v430, %v431
    %v436 = vunpack.c.l.s4 1966171168
    %v437 = vunpack.c.0.s8 %v436
    %v438 = vlaneseq
    %v439 = vshrl.u32 %v438, 7
    %v440 = vsub.s32 %v437, %v439
    %v441 = vrot.slane %v434, %v440
    %v443 = vunpack.c.l.s4 1966171168
    %v444 = vunpack.c.0.s8 %v443
    %v445 = vlaneseq
    %v446 = vshrl.u32 %v445, 7
    %v447 = vsub.s32 %v444, %v446
    %v448 = vrot.slane %v441, %v447
    %v450 = vsub.f32 %v363, %v448
    %v451 = vmul.f32 %v356, %v423
    %v452 = vmul.f32 %v358, %v427
    %v454 = vlaneseq
    %v455 = vshrl.u32 %v454, 7
    %v456 = vsub.s32 0, %v455
    %v457 = vrot.slane %v450, %v456
    %v458 = vlaneseq
    %v459 = vshrl.u32 %v458, 7
    %v460 = vsub.s32 1, %v459
    %v461 = vrot.slane %v450, %v460
    %v464 = vadd.f32 %v451, %v457
    %v465 = vadd.f32 %v452, %v461
    %v466 = vmax.f32 %v464, 0.0
    %v467 = vmax.f32 %v465, 0.0
    %v468 = vld [vmem:[%s3] sm:$0xff]
    %v469 = vld [vmem:[%s3 + $0x8] sm:$0xff]
    %v470 = vld [vmem:[%s3 + $0x10] sm:$0xff]
    %v471 = vld [vmem:[%s3 + $0x18] sm:$0xff]
    %v472 = vld [vmem:[%s3 + $0x20] sm:$0xff]
    %v473 = vld [vmem:[%s3 + $0x28] sm:$0xff]
    %v474 = vld [vmem:[%s3 + $0x30] sm:$0xff]
    %v475 = vld [vmem:[%s3 + $0x38] sm:$0xff]
    %v476 = vld [vmem:[%s3 + $0x40] sm:$0xff]
    %v477 = vld [vmem:[%s3 + $0x48] sm:$0xff]
    %v478 = vld [vmem:[%s3 + $0x50] sm:$0xff]
    %v479 = vld [vmem:[%s3 + $0x58] sm:$0xff]
    %v480 = vld [vmem:[%s3 + $0x60] sm:$0xff]
    %v481 = vld [vmem:[%s3 + $0x68] sm:$0xff]
    %v482 = vld [vmem:[%s3 + $0x70] sm:$0xff]
    %v483 = vld [vmem:[%s3 + $0x78] sm:$0xff]
    %v484 = vld [vmem:[%s3 + $0x80] sm:$0xff]
    %v485 = vld [vmem:[%s3 + $0x88] sm:$0xff]
    %v486 = vld [vmem:[%s3 + $0x90] sm:$0xff]
    %v487 = vld [vmem:[%s3 + $0x98] sm:$0xff]
    %v488 = vld [vmem:[%s3 + $0xa0] sm:$0xff]
    %v489 = vld [vmem:[%s3 + $0xa8] sm:$0xff]
    %v490 = vld [vmem:[%s3 + $0xb0] sm:$0xff]
    %v491 = vld [vmem:[%s3 + $0xb8] sm:$0xff]
    %v492 = vld [vmem:[%s3 + $0xc0] sm:$0xff]
    %v493 = vld [vmem:[%s3 + $0xc8] sm:$0xff]
    %v494 = vld [vmem:[%s3 + $0xd0] sm:$0xff]
    %v495 = vld [vmem:[%s3 + $0xd8] sm:$0xff]
    %v496 = vld [vmem:[%s3 + $0xe0] sm:$0xff]
    %v497 = vld [vmem:[%s3 + $0xe8] sm:$0xff]
    %v498 = vld [vmem:[%s3 + $0xf0] sm:$0xff]
    %v499 = vld [vmem:[%s3 + $0xf8] sm:$0xff]
    %500 = vmatprep.subr.mxu0 0.0
    %501 = vmatpush1.msra.mxu0 %v468
    %502 = vmatprep.subr.mxu0 0.0
    %503 = vmatpush1.msra.mxu0 %v469
    %504 = vmatprep.subr.mxu0 0.0
    %505 = vmatpush1.msra.mxu0 %v470
    %506 = vmatprep.subr.mxu0 0.0
    %507 = vmatpush1.msra.mxu0 %v471
    %508 = vmatprep.subr.mxu0 0.0
    %509 = vmatpush1.msra.mxu0 %v472
    %510 = vmatprep.subr.mxu0 0.0
    %511 = vmatpush1.msra.mxu0 %v473
    %512 = vmatprep.subr.mxu0 0.0
    %513 = vmatpush1.msra.mxu0 %v474
    %514 = vmatprep.subr.mxu0 0.0
    %515 = vmatpush1.msra.mxu0 %v475
    %516 = vmatprep.subr.mxu0 0.0
    %517 = vmatpush1.msra.mxu0 %v476
    %518 = vmatprep.subr.mxu0 0.0
    %519 = vmatpush1.msra.mxu0 %v477
    %520 = vmatprep.subr.mxu0 0.0
    %521 = vmatpush1.msra.mxu0 %v478
    %522 = vmatprep.subr.mxu0 0.0
    %523 = vmatpush1.msra.mxu0 %v479
    %524 = vmatprep.subr.mxu0 0.0
    %525 = vmatpush1.msra.mxu0 %v480
    %526 = vmatprep.subr.mxu0 0.0
    %527 = vmatpush1.msra.mxu0 %v481
    %528 = vmatprep.subr.mxu0 0.0
    %529 = vmatpush1.msra.mxu0 %v482
    %530 = vmatprep.subr.mxu0 0.0
    %531 = vmatpush1.msra.mxu0 %v483
    %532 = vmatprep.subr.mxu0 0.0
    %533 = vmatpush1.msra.mxu0 %v484
    %534 = vmatprep.subr.mxu0 0.0
    %535 = vmatpush1.msra.mxu0 %v485
    %536 = vmatprep.subr.mxu0 0.0
    %537 = vmatpush1.msra.mxu0 %v486
    %538 = vmatprep.subr.mxu0 0.0
    %539 = vmatpush1.msra.mxu0 %v487
    %540 = vmatprep.subr.mxu0 0.0
    %541 = vmatpush1.msra.mxu0 %v488
    %542 = vmatprep.subr.mxu0 0.0
    %543 = vmatpush1.msra.mxu0 %v489
    %544 = vmatprep.subr.mxu0 0.0
    %545 = vmatpush1.msra.mxu0 %v490
    %546 = vmatprep.subr.mxu0 0.0
    %547 = vmatpush1.msra.mxu0 %v491
    %548 = vmatprep.subr.mxu0 0.0
    %549 = vmatpush1.msra.mxu0 %v492
    %550 = vmatprep.subr.mxu0 0.0
    %551 = vmatpush1.msra.mxu0 %v493
    %552 = vmatprep.subr.mxu0 0.0
    %553 = vmatpush1.msra.mxu0 %v494
    %554 = vmatprep.subr.mxu0 0.0
    %555 = vmatpush1.msra.mxu0 %v495
    %556 = vmatprep.subr.mxu0 0.0
    %557 = vmatpush1.msra.mxu0 %v496
    %558 = vmatprep.subr.mxu0 0.0
    %559 = vmatpush1.msra.mxu0 %v497
    %560 = vmatprep.subr.mxu0 0.0
    %561 = vmatpush1.msra.mxu0 %v498
    %562 = vmatprep.subr.mxu0 0.0
    %563 = vmatpush1.msra.mxu0 %v499
    %564 = vmatprep.mubr.f32.mxu0 %v467
    %565 = vmatmul.mubr.f32.gmra.mrb[0].mxu0 %v466
    %v566 = vpop.f32.mrb[0].mxu0
    %v567 = vadd.f32 0.0, %v566
    %v568 = vpop.f32.mrb[0].mxu0
    %569 = vdwg.mxu0
    %vm570 = vcmask 15360
    %571 = vst.msk [vmem:[%s5] sm:$0xff] %vm570, %v567
    // Predicated region
    $region26: #{tpu_custom_call.1} parent=1 // pred_check
      _
    $region27: #{tpu_custom_call.1} parent=1 // pred_check_branch
      %573 = sbr.rel (0) target = $region29
    $region28: #{tpu_custom_call.1} parent=1 // pred_region
      _
    $region29: #{tpu_custom_call.1} parent=1 // pred_fallthru
      _
    // Predicated region
    $region30: #{tpu_custom_call.1} parent=1 // pred_check
      _
    $region31: #{tpu_custom_call.1} parent=1 // pred_check_branch
      %575 = sbr.rel (0) target = $region33
    $region32: #{tpu_custom_call.1} parent=1 // pred_region
      _
    $region33: #{tpu_custom_call.1} parent=1 // pred_fallthru
      _
    %576 = vsyncpa [#allocation3], 1

</llo_original>
